<compile_context>
chip_gen: v7x
topology: tpu7x:2x2x1
jax: 0.10.0
libtpu: 0.0.40
codegen_flags: <defaults>
</compile_context>

<pallas_src>
import math

import jax
import jax.numpy as jnp
from jax.experimental import pallas as pl
from jax.experimental.pallas import tpu as pltpu

_MIB = 1024 * 1024


def _prelu_kernel(x_ref, alpha_ref, o_ref):
    x = x_ref[...]                           # (row_tile, W)
    alpha = alpha_ref[...]                   # (1, W) -> broadcasts over rows
    one = jnp.ones((), dtype=x.dtype)
    o_ref[...] = x * jnp.where(x >= 0, one, alpha)


def _tile_target_bytes():
    """Per-buffer tile-size target, derived from the part's VMEM capacity.

    v7x (64 MiB VMEM, ~3.2 TB/s HBM) wants bigger tiles so the ~0.35us
    per-grid-step overhead stays small relative to DMA time; v5e/v6e (128 MiB
    VMEM) use 4 MiB.  Falls back to 4 MiB if the query is unavailable.
    """
    cap = 128 * _MIB
    try:
        info = pltpu.get_tpu_info()
        cap = int(getattr(info, "vmem_capacity_bytes", cap) or cap)
    except Exception:
        pass
    if cap <= 80 * _MIB:                     # v7x-class part
        return 6 * _MIB
    return 4 * _MIB                          # v5e / v6e


def _choose_row_tile(packed_rows, lane_width, itemsize, target_bytes):
    row_bytes = max(1, lane_width * itemsize)
    t = max(32, (target_bytes // row_bytes) // 32 * 32)     # 32-row aligned
    if t >= packed_rows:
        # Whole array fits one tile.  If it is big enough, split into two
        # balanced halves so both v7x TensorCores get work (neutral on v5e/v6e).
        if packed_rows >= 64:
            half = -(-packed_rows // 2)
            return int(((half + 31) // 32) * 32)
        return int(packed_rows)              # full dim == always legal
    grid = -(-packed_rows // t)
    if grid % 2 == 1:
        # Round the grid up to an even step count so the two v7x TensorCores
        # stay balanced (e.g. grid=3 leaves one core with 2x the work).
        t_even = ((-(-packed_rows // (grid + 1)) + 31) // 32) * 32
        if 0 < t_even < t:
            t = t_even
    return int(t)


def prelu_pallas(x, alpha):
    """x: (..., hidden); alpha: (hidden,). Returns same shape/dtype as x."""
    orig_shape = x.shape
    hidden = orig_shape[-1]
    assert alpha.shape == (hidden,)

    rows = int(math.prod(orig_shape[:-1])) if len(orig_shape) > 1 else 1
    x2d = x.reshape(rows, hidden)

    # --- lane packing -------------------------------------------------------
    # Smallest fold k0 such that hidden*k0 is a multiple of 128 (lcm-based).
    # Only fold when rows % k0 == 0 so no host-side pad / slice passes over HBM
    # are needed; otherwise keep the full-width last axis (legal, masked stores).
    k0 = 128 // math.gcd(hidden, 128)
    if k0 > 1 and hidden * k0 <= 4096 and rows % k0 == 0:
        k = k0
    else:
        k = 1
    lane_w = hidden * k

    if k > 1:
        packed_rows = rows // k
        xk = x2d.reshape(packed_rows, lane_w)        # free reshape (row-major)
        alpha_lane = jnp.tile(alpha, k)              # periodic broadcast pattern
    else:
        packed_rows = rows
        xk = x2d
        alpha_lane = alpha

    # TODO(synk): for bf16 activations PyTorch multiplies by the f32 alpha
    # parameter; load alpha as f32 and cast after the multiply if bit-exact
    # mixed-precision parity is ever required.
    alpha2d = alpha_lane.reshape(1, lane_w).astype(x.dtype)

    itemsize = jnp.dtype(x.dtype).itemsize
    row_tile = _choose_row_tile(packed_rows, lane_w, itemsize, _tile_target_bytes())
    grid = (-(-packed_rows // row_tile),)

    # Explicit scoped-VMEM budget: double-buffered input + output tiles + alpha
    # + headroom.  Keeps v5e's 16 MiB default from capping the tile size and
    # stays well under v7x's 64 MiB physical VMEM.
    tile_bytes = row_tile * lane_w * itemsize
    vmem_limit = int(min(max(4 * tile_bytes + 4 * _MIB, 16 * _MIB), 64 * _MIB))

    n_elems = x.size
    cost = pl.CostEstimate(
        flops=3 * n_elems,                   # compare + select + multiply
        transcendentals=0,
        bytes_accessed=2 * n_elems * itemsize + lane_w * itemsize,
    )

    outk = pl.pallas_call(
        _prelu_kernel,
        out_shape=jax.ShapeDtypeStruct((packed_rows, lane_w), x.dtype),
        grid_spec=pltpu.PrefetchScalarGridSpec(
            num_scalar_prefetch=0,
            grid=grid,
            in_specs=[
                pl.BlockSpec((row_tile, lane_w), lambda i: (i, 0)),
                pl.BlockSpec((1, lane_w), lambda i: (0, 0)),
            ],
            out_specs=pl.BlockSpec((row_tile, lane_w), lambda i: (i, 0)),
        ),
        compiler_params=pltpu.CompilerParams(
            dimension_semantics=("parallel",),   # independent rows -> both TCs on v7x
            vmem_limit_bytes=vmem_limit,
        ),
        cost_estimate=cost,
    )(xk, alpha2d)

    out2d = outk.reshape(rows, hidden) if k > 1 else outk
    return out2d.reshape(orig_shape)


def _reference(x, alpha):
    return jnp.maximum(0.0, x) + alpha * jnp.minimum(0.0, x)


if __name__ == "__main__":
    key = jax.random.PRNGKey(0)

    # --- small demo shape matching the module (hidden = input_dim = 32) --------
    batch, seq, hidden = 2, 8, 32
    x = jax.random.normal(key, (batch, seq, hidden), dtype=jnp.float32)
    alpha = jnp.full((hidden,), 0.1, dtype=jnp.float32)   # constant_(0.1) init

    out = jax.block_until_ready(prelu_pallas(x, alpha))
    ref = _reference(x, alpha)
    assert out.shape == x.shape
    assert jnp.allclose(out, ref, atol=1e-6, rtol=1e-6)

    # --- larger shape: exercises multi-step, even-length grid ------------------
    k2 = jax.random.PRNGKey(1)
    hidden2 = 256
    x2 = jax.random.normal(k2, (8, 500, hidden2), dtype=jnp.float32)
    alpha2 = jnp.full((hidden2,), 0.1, dtype=jnp.float32)
    out2 = jax.block_until_ready(prelu_pallas(x2, alpha2))
    ref2 = _reference(x2, alpha2)
    assert out2.shape == x2.shape
    assert jnp.allclose(out2, ref2, atol=1e-6, rtol=1e-6)

    # --- hidden not dividing 128: exercises lcm-based lane packing (k=4) -------
    k3 = jax.random.PRNGKey(2)
    hidden3 = 96
    x3 = jax.random.normal(k3, (4, 24, hidden3), dtype=jnp.float32)
    alpha3 = jnp.full((hidden3,), 0.1, dtype=jnp.float32)
    out3 = jax.block_until_ready(prelu_pallas(x3, alpha3))
    ref3 = _reference(x3, alpha3)
    assert out3.shape == x3.shape
    assert jnp.allclose(out3, ref3, atol=1e-6, rtol=1e-6)

    print("KERNEL_OK")
</pallas_src>

<mosaic_0001>
module attributes {stable_mosaic.version = 11 : i64} {
  func.func @_prelu_kernel(%arg0: i32, %arg1: memref<4x128xf32, #tpu.memory_space<vmem>>, %arg2: memref<1x128xf32, #tpu.memory_space<vmem>>, %arg3: memref<4x128xf32, #tpu.memory_space<vmem>>) attributes {dimension_semantics = [#tpu.dimension_semantics<parallel>], iteration_bounds = array<i64: 1>, scalar_prefetch = 0 : i64, scratch_operands = 0 : i64, tpu.core_type = #tpu.core_type<tc>, window_params = [{transform_indices = @transform_0, window_bounds = array<i64: 4, 128>}, {pipeline_mode = #tpu.pipeline_mode<synchronous>, transform_indices = @transform_1, window_bounds = array<i64: 1, 128>}, {transform_indices = @transform_2, window_bounds = array<i64: 4, 128>}]} {
    %c0 = arith.constant 0 : index
    %c0_0 = arith.constant 0 : index
    %0 = vector.load %arg1[%c0, %c0_0] : memref<4x128xf32, #tpu.memory_space<vmem>>, vector<4x128xf32>
    %c0_1 = arith.constant 0 : index
    %c0_2 = arith.constant 0 : index
    %1 = vector.load %arg2[%c0_1, %c0_2] : memref<1x128xf32, #tpu.memory_space<vmem>>, vector<1x128xf32>
    %cst = arith.constant 0.000000e+00 : f32
    %2 = vector.broadcast %cst : f32 to vector<4x128xf32>
    %3 = arith.cmpf oge, %0, %2 : vector<4x128xf32>
    %cst_3 = arith.constant 1.000000e+00 : f32
    %4 = vector.broadcast %cst_3 : f32 to vector<4x128xf32>
    %5 = vector.shape_cast %1 : vector<1x128xf32> to vector<1x128xf32>
    %6 = vector.broadcast %5 : vector<1x128xf32> to vector<4x128xf32>
    %7 = arith.select %3, %4, %6 : vector<4x128xi1>, vector<4x128xf32>
    %8 = arith.mulf %0, %7 : vector<4x128xf32>
    %c0_4 = arith.constant 0 : index
    %c0_5 = arith.constant 0 : index
    %9 = vector.load %arg3[%c0_4, %c0_5] : memref<4x128xf32, #tpu.memory_space<vmem>>, vector<4x128xf32>
    tpu.vector_store %arg3[%c0_4, %c0_5], %8 {strides = array<i32>} : memref<4x128xf32, #tpu.memory_space<vmem>>, vector<4x128xf32>,
    return
  }
  func.func @transform_0(%arg0: i32) -> (i32, i32) {
    %c0_i32 = arith.constant 0 : i32
    %c0_i32_0 = arith.constant 0 : i32
    return %arg0, %c0_i32 : i32, i32
  }
  func.func @transform_1(%arg0: i32) -> (i32, i32) {
    %c0_i32 = arith.constant 0 : i32
    %c0_i32_0 = arith.constant 0 : i32
    %c0_i32_1 = arith.constant 0 : i32
    return %c0_i32, %c0_i32_0 : i32, i32
  }
  func.func @transform_2(%arg0: i32) -> (i32, i32) {
    %c0_i32 = arith.constant 0 : i32
    %c0_i32_0 = arith.constant 0 : i32
    return %arg0, %c0_i32 : i32, i32
  }
}

</mosaic_0001>

<llo_original>
// kernel: tpu_custom_call.1
$region0: #{tpu_custom_call.1}
  #allocation0 [shape = 'u32[]', space=smem, size = 0x4, offset = 0x4, fixed_abs, tag = 'smem constant byte address 0x4 - core index']
  #allocation1 [shape = 'u32[144,128]{1,0:T(1,128)}', space=vmem, size = 0x12000, scoped, tag = 'internal scratch']
  %s0 = inlined_call_operand.hbm [shape: f32[4,128], index: 0, kind: input, shape index: {}]
  %s1 = inlined_call_operand.vmem [shape: f32[1,128], index: 1, kind: input, shape index: {}]
  %s2 = inlined_call_operand.hbm [shape: f32[4,128], index: 2, kind: output, shape index: {}]
  %s3 = sld [smem:[#allocation0]]
  $region22: #{tpu_custom_call.1} parent=0
    _
  %s5 = ssub.s32 1, %s3
  %s6 = scalar_select 0, %s5, %s3
  $region1: #{tpu_custom_call.1} parent=0
    #allocation2 [shape = 'u8[2048]{0}', space=vmem, size = 0x800, scoped, tag = 'input window, operand 0, single buffered']
    #allocation3 [shape = 's32[1]{0}', space=sflag, size = 0x4, scoped, tag = 'scoped memory for tpu_custom_call.1']
    #allocation4 [shape = 's32[1]{0}', space=sflag, size = 0x4, scoped, tag = 'scoped memory for tpu_custom_call.1']
    #allocation5 [shape = 'u8[2048]{0}', space=vmem, size = 0x800, scoped, tag = 'output window, operand 0, single buffered']
    %7 = vsyncpa [#allocation3], 0
    %8 = vsyncpa [#allocation4], 0
    // Predicated region
    $region2: #{tpu_custom_call.1} parent=1 // pred_check
      _
    $region3: #{tpu_custom_call.1} parent=1 // pred_check_branch
      %10 = sbr.rel (0) target = $region5
    $region4: #{tpu_custom_call.1} parent=1 // pred_region
      %s12 = ssub.s32 64, 64
      %13 = vsyncadd [#allocation3], %s12
      %s15 = sshll.u32 [#allocation2], 4
      %s16 = int_to_ptr.vmem [resolvable:$true] %s15
      %18 = dma.hbm_to_vmem [thread:$0]  %s0, 64, %s16, [#allocation3]
    $region5: #{tpu_custom_call.1} parent=1 // pred_fallthru
      _
    // Predicated region
    $region6: #{tpu_custom_call.1} parent=1 // pred_check
      _
    $region7: #{tpu_custom_call.1} parent=1 // pred_check_branch
      %20 = sbr.rel (0) target = $region9
    $region8: #{tpu_custom_call.1} parent=1 // pred_region
      _
    $region9: #{tpu_custom_call.1} parent=1 // pred_fallthru
      _
    // Predicated region
    $region10: #{tpu_custom_call.1} parent=1 // pred_check
      _
    $region11: #{tpu_custom_call.1} parent=1 // pred_check_branch
      %22 = sbr.rel (0) target = $region13
    $region12: #{tpu_custom_call.1} parent=1 // pred_region
      %23 = dma.done [#allocation3], 64
    $region13: #{tpu_custom_call.1} parent=1 // pred_fallthru
      _
    %v24 = vld [vmem:[#allocation2] sm:$0xf]
    %v25 = vld [vmem:[%s1] sm:$0x1]
    %vm26 = vcmp.ge.f32.partialorder %v24, 0.0
    %v28 = vlaneseq
    %v29 = vshrl.u32 %v28, 7
    %v30 = vsub.s32 0, %v29
    %v31 = vrot.slane %v25, %v30
    %v33 = vsel %vm26, 1.0, %v31
    %v34 = vmul.f32 %v24, %v33
    %35 = vst [vmem:[#allocation5] sm:$0xf] %v34
    // Predicated region
    $region14: #{tpu_custom_call.1} parent=1 // pred_check
      _
    $region15: #{tpu_custom_call.1} parent=1 // pred_check_branch
      %37 = sbr.rel (0) target = $region17
    $region16: #{tpu_custom_call.1} parent=1 // pred_region
      %s39 = ssub.s32 64, 64
      %40 = vsyncadd [#allocation4], %s39
      %s42 = sshll.u32 [#allocation5], 4
      %s43 = int_to_ptr.vmem [resolvable:$true] %s42
      %45 = dma.vmem_to_hbm [thread:$0]  %s43, 64, %s2, [#allocation4]
    $region17: #{tpu_custom_call.1} parent=1 // pred_fallthru
      _
    // Predicated region
    $region18: #{tpu_custom_call.1} parent=1 // pred_check
      _
    $region19: #{tpu_custom_call.1} parent=1 // pred_check_branch
      %47 = sbr.rel (0) target = $region21
    $region20: #{tpu_custom_call.1} parent=1 // pred_region
      %48 = dma.done [#allocation4], 64
    $region21: #{tpu_custom_call.1} parent=1 // pred_fallthru
      _
    %49 = vsyncpa [#allocation3], 1
    %50 = vsyncpa [#allocation4], 1

</llo_original>
